<compile_context>
chip_gen: v6e
topology: v6e:2x2x1
jax: 0.10.0
libtpu: 0.0.40
codegen_flags: <defaults>
</compile_context>

<pallas_src>
import jax
import jax.numpy as jnp
from jax.experimental import pallas as pl
from jax.experimental.pallas import tpu as pltpu

# ---------------------------- sizes (consistent with the module) ------------
AE_INPUT_SIZE = 16          # flattened obstacle-cloud input to the encoder
TOTAL_INPUT_SIZE = 8        # state input x
MLP_INPUT_SIZE = 32         # encoder latent (24) + x (8)
OUTPUT_SIZE = 4
LATENT = MLP_INPUT_SIZE - TOTAL_INPUT_SIZE   # 24
ENC_H1, ENC_H2 = 64, 32
MLP_H1, MLP_H2 = 64, 32

LANES = 128                 # hidden feature dims zero-padded to one vreg row
INP_W = 32                  # combined HBM input width: obs[0:16] | x[16:24] | 0[24:32]
N_W = 6                     # packed weight matrices (enc L3 folded into MLP L1)
DEFAULT_TILE_B = 512        # batch rows per grid step (sweep 512/1024/2048)


def _round_up(v, m):
    return (v + m - 1) // m * m


def _prelu(v, a):
    # PyTorch nn.PReLU with a single shared scalar parameter a (init 0.25).
    return jnp.maximum(v, 0.0) + a * jnp.minimum(v, 0.0)


def kmpnet_kernel(inp_ref, w_ref, b_ref, alpha_ref, out_ref):
    # inp_ref : (tile_b, 32) f32   obs | x | zeros  (narrow, lane-dense)
    # w_ref   : (6, 128, 128) bf16 zero-padded weight slab, resident in VMEM
    #   [0]=enc_w1 (rows 0..15)          [1]=enc_w2 (rows 0..63)
    #   [2]=enc_w3 @ mlp_w1[z] (rows 0..31, fused linear-into-linear)
    #   [3]=mlp_w1[x] (rows 16..23, aligned with x's position in the input)
    #   [4]=mlp_w2 (rows 0..63)          [5]=mlp_w3 (rows 0..31)
    # b_ref   : (8, 128) f32 bias slab (rows 0..4 used), resident in VMEM
    # alpha_ref: (4,) f32 in SMEM: [enc_a1, enc_a2, mlp_a1, mlp_a2]
    # out_ref : (tile_b, OUTPUT_SIZE) f32
    inp_bf = inp_ref[...].astype(jnp.bfloat16)
    b = b_ref[...]

    a_e1 = alpha_ref[0]
    a_e2 = alpha_ref[1]
    a_m1 = alpha_ref[2]
    a_m2 = alpha_ref[3]

    # ----- encoder layer 1: obs -> 64 (true K = 32; x rows hit zero weights) -
    h = jnp.dot(inp_bf, w_ref[0, :INP_W, :],
                preferred_element_type=jnp.float32) + b[0:1, :]
    h = _prelu(h, a_e1).astype(jnp.bfloat16)

    # ----- encoder layer 2: 64 -> 32 ----------------------------------------
    h = jnp.dot(h, w_ref[1], preferred_element_type=jnp.float32) + b[1:2, :]
    h = _prelu(h, a_e2).astype(jnp.bfloat16)

    # ----- fused (encoder layer 3 o MLP layer 1):  h2 @ (ew3 @ mw1z) + x@mw1x
    # This is exactly concat([z, x]) @ mlp_w1 + mlp_b1 with z = h2 @ ew3 + eb3.
    m = (jnp.dot(h, w_ref[2], preferred_element_type=jnp.float32)
         + jnp.dot(inp_bf, w_ref[3, :INP_W, :],
                   preferred_element_type=jnp.float32)
         + b[2:3, :])
    m = _prelu(m, a_m1).astype(jnp.bfloat16)

    # ----- MLP layer 2: 64 -> 32 ---------------------------------------------
    m = jnp.dot(m, w_ref[4], preferred_element_type=jnp.float32) + b[3:4, :]
    m = _prelu(m, a_m2).astype(jnp.bfloat16)

    # ----- MLP layer 3: 32 -> 4 ; store only the useful lanes -----------------
    y = jnp.dot(m, w_ref[5], preferred_element_type=jnp.float32) + b[4:5, :]
    out_ref[...] = y[:, :OUTPUT_SIZE]


def kmpnet_forward(x, obs, params, tile_b=DEFAULT_TILE_B):
    """x: (B, TOTAL_INPUT_SIZE), obs: (B, AE_INPUT_SIZE) -> (B, OUTPUT_SIZE)."""
    B = x.shape[0]
    b8 = _round_up(B, 8)
    tb = min(tile_b, b8)
    # For mid-sized batches that would otherwise give a single grid step, split
    # into two so both v7x TensorCores get work (harmless on v5e/v6e).
    if b8 <= tb and b8 >= 256:
        tb = _round_up(pl.cdiv(b8, 2), 8)
    steps = pl.cdiv(b8, tb)
    b_pad = steps * tb

    # Single narrow combined input: obs | x | zero-pad to INP_W lanes,
    # batch-padded to a multiple of the batch tile.
    inp = jnp.concatenate([obs.astype(jnp.float32), x.astype(jnp.float32)],
                          axis=1)
    inp = jnp.pad(inp, ((0, b_pad - B),
                        (0, INP_W - (AE_INPUT_SIZE + TOTAL_INPUT_SIZE))))

    out = pl.pallas_call(
        kmpnet_kernel,
        out_shape=jax.ShapeDtypeStruct((b_pad, OUTPUT_SIZE), jnp.float32),
        grid=(steps,),
        in_specs=[
            pl.BlockSpec((tb, INP_W), lambda i: (i, 0)),                # input tile
            pl.BlockSpec((N_W, LANES, LANES), lambda i: (0, 0, 0)),     # weights (resident)
            pl.BlockSpec((8, LANES), lambda i: (0, 0)),                 # biases  (resident)
            pl.BlockSpec(memory_space=pltpu.MemorySpace.SMEM),          # PReLU alphas
        ],
        out_specs=pl.BlockSpec((tb, OUTPUT_SIZE), lambda i: (i, 0)),    # narrow output
        compiler_params=pltpu.CompilerParams(
            dimension_semantics=("parallel",)),
    )(inp, params["w"], params["b"], params["alphas"])
    return out[:B, :]


# ---------------------------- parameter construction ------------------------
def init_params(key):
    ks = jax.random.split(key, 8)

    def lin(k, fan_in, fan_out):
        # deterministic, torch-Linear-like uniform init
        kw, kb = jax.random.split(k)
        bound = 1.0 / jnp.sqrt(fan_in)
        w = jax.random.uniform(kw, (fan_in, fan_out), jnp.float32, -bound, bound)
        b = jax.random.uniform(kb, (fan_out,), jnp.float32, -bound, bound)
        return w, b

    ew1, eb1 = lin(ks[0], AE_INPUT_SIZE, ENC_H1)
    ew2, eb2 = lin(ks[1], ENC_H1, ENC_H2)
    ew3, eb3 = lin(ks[2], ENC_H2, LATENT)
    mw1, mb1 = lin(ks[3], MLP_INPUT_SIZE, MLP_H1)
    mw2, mb2 = lin(ks[4], MLP_H1, MLP_H2)
    mw3, mb3 = lin(ks[5], MLP_H2, OUTPUT_SIZE)

    # Fold the linear encoder output layer into the MLP first layer (exact).
    mw1z, mw1x = mw1[:LATENT, :], mw1[LATENT:, :]
    w_fused = ew3 @ mw1z                      # (ENC_H2, MLP_H1)
    b_fused = eb3 @ mw1z + mb1                # (MLP_H1,)

    # ---- packed slabs for the kernel (bf16 weights, f32 biases) -------------
    w = jnp.zeros((N_W, LANES, LANES), jnp.float32)
    w = w.at[0, :AE_INPUT_SIZE, :ENC_H1].set(ew1)
    w = w.at[1, :ENC_H1, :ENC_H2].set(ew2)
    w = w.at[2, :ENC_H2, :MLP_H1].set(w_fused)
    w = w.at[3, AE_INPUT_SIZE:AE_INPUT_SIZE + TOTAL_INPUT_SIZE, :MLP_H1].set(mw1x)
    w = w.at[4, :MLP_H1, :MLP_H2].set(mw2)
    w = w.at[5, :MLP_H2, :OUTPUT_SIZE].set(mw3)
    w = w.astype(jnp.bfloat16)

    b = jnp.zeros((8, LANES), jnp.float32)
    b = b.at[0, :ENC_H1].set(eb1)
    b = b.at[1, :ENC_H2].set(eb2)
    b = b.at[2, :MLP_H1].set(b_fused)
    b = b.at[3, :MLP_H2].set(mb2)
    b = b.at[4, :OUTPUT_SIZE].set(mb3)

    alphas = jnp.full((4,), 0.25, jnp.float32)   # nn.PReLU() default init

    params = {"w": w, "b": b, "alphas": alphas}
    # keep unpacked f32 copies for the pure-JAX reference
    raw = dict(ew1=ew1, eb1=eb1, ew2=ew2, eb2=eb2, ew3=ew3, eb3=eb3,
               mw1=mw1, mb1=mb1, mw2=mw2, mb2=mb2, mw3=mw3, mb3=mb3)
    return params, raw


def reference_forward(x, obs, raw, alphas):
    # Pure-JAX f32 reference replicating the torch module exactly (unfused).
    def prelu(v, a):
        return jnp.maximum(v, 0.0) + a * jnp.minimum(v, 0.0)
    h = prelu(obs @ raw["ew1"] + raw["eb1"], alphas[0])
    h = prelu(h @ raw["ew2"] + raw["eb2"], alphas[1])
    z = h @ raw["ew3"] + raw["eb3"]
    mlp_in = jnp.concatenate([z, x], axis=1)              # torch.cat((z, x), 1)
    m = prelu(mlp_in @ raw["mw1"] + raw["mb1"], alphas[2])
    m = prelu(m @ raw["mw2"] + raw["mb2"], alphas[3])
    return m @ raw["mw3"] + raw["mb3"]


# TODO(synk): loss/step/set_opt (Adagrad training loop) are host-side training
# utilities with no kernel equivalent; only forward() is implemented here.

if __name__ == "__main__":
    key = jax.random.PRNGKey(0)
    kx, kobs, kp = jax.random.split(key, 3)

    BATCH = 16   # small demo batch; kernel tiles/pads the batch dim internally
    x = jax.random.normal(kx, (BATCH, TOTAL_INPUT_SIZE), jnp.float32)
    obs = jax.random.normal(kobs, (BATCH, AE_INPUT_SIZE), jnp.float32)
    params, raw = init_params(kp)

    out = kmpnet_forward(x, obs, params)
    out = jax.block_until_ready(out)

    ref = reference_forward(x, obs, raw, params["alphas"])
    assert out.shape == (BATCH, OUTPUT_SIZE)
    # bf16 matmul operands (f32 accumulation) vs f32 reference -> loosened tol.
    assert jnp.allclose(out, ref, atol=3e-2, rtol=3e-2)
    print("KERNEL_OK")
</pallas_src>

<mosaic_0001>
module attributes {stable_mosaic.version = 11 : i64} {
  func.func @kmpnet_kernel(%arg0: i32, %arg1: memref<16x32xf32, #tpu.memory_space<vmem>>, %arg2: memref<6x128x128xbf16, #tpu.memory_space<vmem>>, %arg3: memref<8x128xf32, #tpu.memory_space<vmem>>, %arg4: memref<4xf32, #tpu.memory_space<smem>>, %arg5: memref<16x4xf32, #tpu.memory_space<vmem>>) attributes {dimension_semantics = [#tpu.dimension_semantics<parallel>], iteration_bounds = array<i64: 1>, scalar_prefetch = 0 : i64, scratch_operands = 0 : i64, tpu.core_type = #tpu.core_type<tc>, window_params = [{transform_indices = @transform_0, window_bounds = array<i64: 16, 32>}, {pipeline_mode = #tpu.pipeline_mode<synchronous>, transform_indices = @transform_1, window_bounds = array<i64: 6, 128, 128>}, {pipeline_mode = #tpu.pipeline_mode<synchronous>, transform_indices = @transform_2, window_bounds = array<i64: 8, 128>}, {transform_indices = @transform_3, window_bounds = array<i64: 4>}, {transform_indices = @transform_4, window_bounds = array<i64: 16, 4>}]} {
    %c0 = arith.constant 0 : index
    %c0_0 = arith.constant 0 : index
    %0 = vector.load %arg1[%c0, %c0_0] : memref<16x32xf32, #tpu.memory_space<vmem>>, vector<16x32xf32>
    %1 = arith.truncf %0 : vector<16x32xf32> to vector<16x32xbf16>
    %c0_1 = arith.constant 0 : index
    %c0_2 = arith.constant 0 : index
    %2 = vector.load %arg3[%c0_1, %c0_2] : memref<8x128xf32, #tpu.memory_space<vmem>>, vector<8x128xf32>
    %c0_3 = arith.constant 0 : index
    %3 = memref.load %arg4[%c0_3] : memref<4xf32, #tpu.memory_space<smem>>
    %c1 = arith.constant 1 : index
    %4 = memref.load %arg4[%c1] : memref<4xf32, #tpu.memory_space<smem>>
    %c2 = arith.constant 2 : index
    %5 = memref.load %arg4[%c2] : memref<4xf32, #tpu.memory_space<smem>>
    %c3 = arith.constant 3 : index
    %6 = memref.load %arg4[%c3] : memref<4xf32, #tpu.memory_space<smem>>
    %c0_4 = arith.constant 0 : index
    %c0_5 = arith.constant 0 : index
    %c0_6 = arith.constant 0 : index
    %7 = vector.load %arg2[%c0_4, %c0_5, %c0_6] : memref<6x128x128xbf16, #tpu.memory_space<vmem>>, vector<1x32x128xbf16>
    %8 = vector.shape_cast %7 : vector<1x32x128xbf16> to vector<32x128xbf16>
    %cst = arith.constant dense<0.000000e+00> : vector<16x128xf32>
    %9 = tpu.matmul %1, %8, %cst {dimension_numbers = #tpu.dot_dimension_numbers<[1], [0], [0], [1], [0, 0, 1, 1], [], []>} : vector<16x32xbf16>, vector<32x128xbf16>, vector<16x128xf32> -> vector<16x128xf32>
    %10 = vector.extract_strided_slice %2 {offsets = [0, 0], sizes = [1, 128], strides = [1, 1]} : vector<8x128xf32> to vector<1x128xf32>
    %11 = vector.broadcast %10 : vector<1x128xf32> to vector<16x128xf32>
    %12 = arith.addf %9, %11 : vector<16x128xf32>
    %cst_7 = arith.constant 0.000000e+00 : f32
    %13 = vector.broadcast %cst_7 : f32 to vector<16x128xf32>
    %14 = arith.maximumf %12, %13 : vector<16x128xf32>
    %cst_8 = arith.constant 0.000000e+00 : f32
    %15 = vector.broadcast %cst_8 : f32 to vector<16x128xf32>
    %16 = arith.minimumf %12, %15 : vector<16x128xf32>
    %17 = vector.broadcast %3 : f32 to vector<16x128xf32>
    %18 = arith.mulf %17, %16 : vector<16x128xf32>
    %19 = arith.addf %14, %18 : vector<16x128xf32>
    %20 = arith.truncf %19 : vector<16x128xf32> to vector<16x128xbf16>
    %c1_9 = arith.constant 1 : index
    %c0_10 = arith.constant 0 : index
    %c0_11 = arith.constant 0 : index
    %21 = vector.load %arg2[%c1_9, %c0_10, %c0_11] : memref<6x128x128xbf16, #tpu.memory_space<vmem>>, vector<1x128x128xbf16>
    %22 = vector.shape_cast %21 : vector<1x128x128xbf16> to vector<128x128xbf16>
    %cst_12 = arith.constant dense<0.000000e+00> : vector<16x128xf32>
    %23 = tpu.matmul %20, %22, %cst_12 {dimension_numbers = #tpu.dot_dimension_numbers<[1], [0], [0], [1], [0, 0, 1, 1], [], []>} : vector<16x128xbf16>, vector<128x128xbf16>, vector<16x128xf32> -> vector<16x128xf32>
    %24 = vector.extract_strided_slice %2 {offsets = [1, 0], sizes = [1, 128], strides = [1, 1]} : vector<8x128xf32> to vector<1x128xf32>
    %25 = vector.broadcast %24 : vector<1x128xf32> to vector<16x128xf32>
    %26 = arith.addf %23, %25 : vector<16x128xf32>
    %cst_13 = arith.constant 0.000000e+00 : f32
    %27 = vector.broadcast %cst_13 : f32 to vector<16x128xf32>
    %28 = arith.maximumf %26, %27 : vector<16x128xf32>
    %cst_14 = arith.constant 0.000000e+00 : f32
    %29 = vector.broadcast %cst_14 : f32 to vector<16x128xf32>
    %30 = arith.minimumf %26, %29 : vector<16x128xf32>
    %31 = vector.broadcast %4 : f32 to vector<16x128xf32>
    %32 = arith.mulf %31, %30 : vector<16x128xf32>
    %33 = arith.addf %28, %32 : vector<16x128xf32>
    %34 = arith.truncf %33 : vector<16x128xf32> to vector<16x128xbf16>
    %c2_15 = arith.constant 2 : index
    %c0_16 = arith.constant 0 : index
    %c0_17 = arith.constant 0 : index
    %35 = vector.load %arg2[%c2_15, %c0_16, %c0_17] : memref<6x128x128xbf16, #tpu.memory_space<vmem>>, vector<1x128x128xbf16>
    %36 = vector.shape_cast %35 : vector<1x128x128xbf16> to vector<128x128xbf16>
    %cst_18 = arith.constant dense<0.000000e+00> : vector<16x128xf32>
    %37 = tpu.matmul %34, %36, %cst_18 {dimension_numbers = #tpu.dot_dimension_numbers<[1], [0], [0], [1], [0, 0, 1, 1], [], []>} : vector<16x128xbf16>, vector<128x128xbf16>, vector<16x128xf32> -> vector<16x128xf32>
    %c3_19 = arith.constant 3 : index
    %c0_20 = arith.constant 0 : index
    %c0_21 = arith.constant 0 : index
    %38 = vector.load %arg2[%c3_19, %c0_20, %c0_21] : memref<6x128x128xbf16, #tpu.memory_space<vmem>>, vector<1x32x128xbf16>
    %39 = vector.shape_cast %38 : vector<1x32x128xbf16> to vector<32x128xbf16>
    %cst_22 = arith.constant dense<0.000000e+00> : vector<16x128xf32>
    %40 = tpu.matmul %1, %39, %cst_22 {dimension_numbers = #tpu.dot_dimension_numbers<[1], [0], [0], [1], [0, 0, 1, 1], [], []>} : vector<16x32xbf16>, vector<32x128xbf16>, vector<16x128xf32> -> vector<16x128xf32>
    %41 = arith.addf %37, %40 : vector<16x128xf32>
    %42 = vector.extract_strided_slice %2 {offsets = [2, 0], sizes = [1, 128], strides = [1, 1]} : vector<8x128xf32> to vector<1x128xf32>
    %43 = vector.broadcast %42 : vector<1x128xf32> to vector<16x128xf32>
    %44 = arith.addf %41, %43 : vector<16x128xf32>
    %cst_23 = arith.constant 0.000000e+00 : f32
    %45 = vector.broadcast %cst_23 : f32 to vector<16x128xf32>
    %46 = arith.maximumf %44, %45 : vector<16x128xf32>
    %cst_24 = arith.constant 0.000000e+00 : f32
    %47 = vector.broadcast %cst_24 : f32 to vector<16x128xf32>
    %48 = arith.minimumf %44, %47 : vector<16x128xf32>
    %49 = vector.broadcast %5 : f32 to vector<16x128xf32>
    %50 = arith.mulf %49, %48 : vector<16x128xf32>
    %51 = arith.addf %46, %50 : vector<16x128xf32>
    %52 = arith.truncf %51 : vector<16x128xf32> to vector<16x128xbf16>
    %c4 = arith.constant 4 : index
    %c0_25 = arith.constant 0 : index
    %c0_26 = arith.constant 0 : index
    %53 = vector.load %arg2[%c4, %c0_25, %c0_26] : memref<6x128x128xbf16, #tpu.memory_space<vmem>>, vector<1x128x128xbf16>
    %54 = vector.shape_cast %53 : vector<1x128x128xbf16> to vector<128x128xbf16>
    %cst_27 = arith.constant dense<0.000000e+00> : vector<16x128xf32>
    %55 = tpu.matmul %52, %54, %cst_27 {dimension_numbers = #tpu.dot_dimension_numbers<[1], [0], [0], [1], [0, 0, 1, 1], [], []>} : vector<16x128xbf16>, vector<128x128xbf16>, vector<16x128xf32> -> vector<16x128xf32>
    %56 = vector.extract_strided_slice %2 {offsets = [3, 0], sizes = [1, 128], strides = [1, 1]} : vector<8x128xf32> to vector<1x128xf32>
    %57 = vector.broadcast %56 : vector<1x128xf32> to vector<16x128xf32>
    %58 = arith.addf %55, %57 : vector<16x128xf32>
    %cst_28 = arith.constant 0.000000e+00 : f32
    %59 = vector.broadcast %cst_28 : f32 to vector<16x128xf32>
    %60 = arith.maximumf %58, %59 : vector<16x128xf32>
    %cst_29 = arith.constant 0.000000e+00 : f32
    %61 = vector.broadcast %cst_29 : f32 to vector<16x128xf32>
    %62 = arith.minimumf %58, %61 : vector<16x128xf32>
    %63 = vector.broadcast %6 : f32 to vector<16x128xf32>
    %64 = arith.mulf %63, %62 : vector<16x128xf32>
    %65 = arith.addf %60, %64 : vector<16x128xf32>
    %66 = arith.truncf %65 : vector<16x128xf32> to vector<16x128xbf16>
    %c5 = arith.constant 5 : index
    %c0_30 = arith.constant 0 : index
    %c0_31 = arith.constant 0 : index
    %67 = vector.load %arg2[%c5, %c0_30, %c0_31] : memref<6x128x128xbf16, #tpu.memory_space<vmem>>, vector<1x128x128xbf16>
    %68 = vector.shape_cast %67 : vector<1x128x128xbf16> to vector<128x128xbf16>
    %cst_32 = arith.constant dense<0.000000e+00> : vector<16x128xf32>
    %69 = tpu.matmul %66, %68, %cst_32 {dimension_numbers = #tpu.dot_dimension_numbers<[1], [0], [0], [1], [0, 0, 1, 1], [], []>} : vector<16x128xbf16>, vector<128x128xbf16>, vector<16x128xf32> -> vector<16x128xf32>
    %70 = vector.extract_strided_slice %2 {offsets = [4, 0], sizes = [1, 128], strides = [1, 1]} : vector<8x128xf32> to vector<1x128xf32>
    %71 = vector.broadcast %70 : vector<1x128xf32> to vector<16x128xf32>
    %72 = arith.addf %69, %71 : vector<16x128xf32>
    %73 = vector.extract_strided_slice %72 {offsets = [0, 0], sizes = [16, 4], strides = [1, 1]} : vector<16x128xf32> to vector<16x4xf32>
    %c0_33 = arith.constant 0 : index
    %c0_34 = arith.constant 0 : index
    %74 = vector.load %arg5[%c0_33, %c0_34] : memref<16x4xf32, #tpu.memory_space<vmem>>, vector<16x4xf32>
    tpu.vector_store %arg5[%c0_33, %c0_34], %73 {strides = array<i32>} : memref<16x4xf32, #tpu.memory_space<vmem>>, vector<16x4xf32>,
    return
  }
  func.func @transform_0(%arg0: i32) -> (i32, i32) {
    %c0_i32 = arith.constant 0 : i32
    %c0_i32_0 = arith.constant 0 : i32
    return %arg0, %c0_i32 : i32, i32
  }
  func.func @transform_1(%arg0: i32) -> (i32, i32, i32) {
    %c0_i32 = arith.constant 0 : i32
    %c0_i32_0 = arith.constant 0 : i32
    %c0_i32_1 = arith.constant 0 : i32
    %c0_i32_2 = arith.constant 0 : i32
    return %c0_i32, %c0_i32_0, %c0_i32_1 : i32, i32, i32
  }
  func.func @transform_2(%arg0: i32) -> (i32, i32) {
    %c0_i32 = arith.constant 0 : i32
    %c0_i32_0 = arith.constant 0 : i32
    %c0_i32_1 = arith.constant 0 : i32
    return %c0_i32, %c0_i32_0 : i32, i32
  }
  func.func @transform_3(%arg0: i32) -> i32 {
    %c0_i32 = arith.constant 0 : i32
    %c0_i32_0 = arith.constant 0 : i32
    return %c0_i32 : i32
  }
  func.func @transform_4(%arg0: i32) -> (i32, i32) {
    %c0_i32 = arith.constant 0 : i32
    %c0_i32_0 = arith.constant 0 : i32
    return %arg0, %c0_i32 : i32, i32
  }
}

</mosaic_0001>

<llo_original>
// kernel: tpu_custom_call.1
$region0: #{tpu_custom_call.1}
  #allocation0 [shape = 'u32[]', space=smem, size = 0x4, offset = 0x4, fixed_abs, tag = 'smem constant byte address 0x4 - core index']
  #allocation1 [shape = 'u32[144,128]{1,0:T(1,128)}', space=vmem, size = 0x12000, scoped, tag = 'internal scratch']
  %s0 = inlined_call_operand.hbm [shape: f32[16,32], index: 0, kind: input, shape index: {}]
  %s1 = inlined_call_operand.hbm [shape: bf16[6,128,128], index: 1, kind: input, shape index: {}]
  %s2 = inlined_call_operand.hbm [shape: f32[8,128], index: 2, kind: input, shape index: {}]
  %s3 = inlined_call_operand.vmem [shape: f32[4], index: 3, kind: input, shape index: {}]
  %s4 = inlined_call_operand.vmem [shape: f32[16,4], index: 4, kind: output, shape index: {}]
  %s5 = sld [smem:[#allocation0]]
  $region42: #{tpu_custom_call.1} parent=0
    _
  %s7 = ssub.s32 1, %s5
  %s8 = scalar_select 0, %s7, %s5
  $region1: #{tpu_custom_call.1} parent=0
    #allocation2 [shape = 'u8[8192]{0}', space=vmem, size = 0x2000, scoped, tag = 'input window, operand 0, single buffered']
    #allocation3 [shape = 's32[1]{0}', space=sflag, size = 0x4, scoped, tag = 'scoped memory for tpu_custom_call.1']
    #allocation4 [shape = 's32[1]{0}', space=sflag, size = 0x4, scoped, tag = 'scoped memory for tpu_custom_call.1']
    #allocation5 [shape = 'u8[196608]{0}', space=vmem, size = 0x30000, scoped, tag = 'input window, operand 1, single buffered']
    #allocation6 [shape = 's32[1]{0}', space=sflag, size = 0x4, scoped, tag = 'scoped memory for tpu_custom_call.1']
    #allocation7 [shape = 'u8[4096]{0}', space=vmem, size = 0x1000, scoped, tag = 'input window, operand 2, single buffered']
    #allocation8 [shape = 'u8[512]{0}', space=smem, size = 0x200, scoped, tag = 'input window, operand 3, single buffered']
    %9 = vsyncpa [#allocation3], 0
    %10 = vsyncpa [#allocation6], 0
    %11 = vsyncpa [#allocation4], 0
    // Predicated region
    $region2: #{tpu_custom_call.1} parent=1 // pred_check
      _
    $region3: #{tpu_custom_call.1} parent=1 // pred_check_branch
      %13 = sbr.rel (0) target = $region5
    $region4: #{tpu_custom_call.1} parent=1 // pred_region
      %s15 = ssub.s32 256, 256
      %16 = vsyncadd [#allocation3], %s15
      %s17 = sshll.u32 [#allocation2], 4
      %s18 = int_to_ptr.vmem [resolvable:$true] %s17
      %23 = dma.hbm_to_vmem [thread:$0]  %s0, 256, %s18, [#allocation3], 128, 128, 8
    $region5: #{tpu_custom_call.1} parent=1 // pred_fallthru
      _
    // Predicated region
    $region6: #{tpu_custom_call.1} parent=1 // pred_check
      _
    $region7: #{tpu_custom_call.1} parent=1 // pred_check_branch
      %25 = sbr.rel (0) target = $region9
    $region8: #{tpu_custom_call.1} parent=1 // pred_region
      %s27 = ssub.s32 6144, 6144
      %28 = vsyncadd [#allocation6], %s27
      %s29 = sshll.u32 [#allocation5], 4
      %s30 = int_to_ptr.vmem [resolvable:$true] %s29
      %35 = dma.hbm_to_vmem [thread:$0]  %s1, 6144, %s30, [#allocation6], 64, 64, 4
    $region9: #{tpu_custom_call.1} parent=1 // pred_fallthru
      _
    // Predicated region
    $region10: #{tpu_custom_call.1} parent=1 // pred_check
      _
    $region11: #{tpu_custom_call.1} parent=1 // pred_check_branch
      %37 = sbr.rel (0) target = $region13
    $region12: #{tpu_custom_call.1} parent=1 // pred_region
      %s39 = ssub.s32 128, 128
      %40 = vsyncadd [#allocation6], %s39
      %s42 = sshll.u32 [#allocation7], 4
      %s43 = int_to_ptr.vmem [resolvable:$true] %s42
      %45 = dma.hbm_to_vmem [thread:$0]  %s2, 128, %s43, [#allocation6]
    $region13: #{tpu_custom_call.1} parent=1 // pred_fallthru
      _
    // Predicated region
    $region14: #{tpu_custom_call.1} parent=1 // pred_check
      _
    $region15: #{tpu_custom_call.1} parent=1 // pred_check_branch
      %47 = sbr.rel (0) target = $region17
    $region16: #{tpu_custom_call.1} parent=1 // pred_region
      %s49 = ssub.s32 16, 16
      %50 = vsyncadd [#allocation4], %s49
      %s52 = sshll.u32 %s3, 4
      %s53 = int_to_ptr.vmem [resolvable:$true] %s52
      %55 = dma.vmem_to_smem %s53, 16, [#allocation8], [#allocation4]
    $region17: #{tpu_custom_call.1} parent=1 // pred_fallthru
      _
    // Predicated region
    $region18: #{tpu_custom_call.1} parent=1 // pred_check
      _
    $region19: #{tpu_custom_call.1} parent=1 // pred_check_branch
      %57 = sbr.rel (0) target = $region21
    $region20: #{tpu_custom_call.1} parent=1 // pred_region
      %58 = dma.done [#allocation3], 256
    $region21: #{tpu_custom_call.1} parent=1 // pred_fallthru
      _
    // Predicated region
    $region22: #{tpu_custom_call.1} parent=1 // pred_check
      _
    $region23: #{tpu_custom_call.1} parent=1 // pred_check_branch
      %60 = sbr.rel (0) target = $region25
    $region24: #{tpu_custom_call.1} parent=1 // pred_region
      %61 = dma.done [#allocation6], 6144
    $region25: #{tpu_custom_call.1} parent=1 // pred_fallthru
      _
    // Predicated region
    $region26: #{tpu_custom_call.1} parent=1 // pred_check
      _
    $region27: #{tpu_custom_call.1} parent=1 // pred_check_branch
      %63 = sbr.rel (0) target = $region29
    $region28: #{tpu_custom_call.1} parent=1 // pred_region
      %64 = dma.done [#allocation6], 128
    $region29: #{tpu_custom_call.1} parent=1 // pred_fallthru
      _
    // Predicated region
    $region30: #{tpu_custom_call.1} parent=1 // pred_check
      _
    $region31: #{tpu_custom_call.1} parent=1 // pred_check_branch
      %66 = sbr.rel (0) target = $region33
    $region32: #{tpu_custom_call.1} parent=1 // pred_region
      %67 = dma.done [#allocation4], 16
    $region33: #{tpu_custom_call.1} parent=1 // pred_fallthru
      _
    %68 = sfence
    %v70 = vld [vmem:[#allocation2] sm:$0xff]
    %v71 = vld [vmem:[#allocation2 + $0x8] sm:$0xff]
    %v72 = vpack.c.bf16 %v71, %v70
    %v73 = vld [vmem:[#allocation7] sm:$0xff]
    %s74 = sld [smem:[#allocation8]]
    %s75 = sld [smem:[#allocation8 + $0x1]]
    %s76 = sld [smem:[#allocation8 + $0x2]]
    %s77 = sld [smem:[#allocation8 + $0x3]]
    %v78 = vld [vmem:[#allocation5] sm:$0xf]
    %v79 = vld [vmem:[#allocation5 + $0x4] sm:$0xf]
    %v80 = vld [vmem:[#allocation5 + $0x8] sm:$0xf]
    %v81 = vld [vmem:[#allocation5 + $0xc] sm:$0xf]
    %v82 = vlaneseq
    %v83 = vshrl.u32 %v82, 7
    %v84 = vsub.s32 0, %v83
    %v85 = vrot.slane %v73, %v84
    %v90 = vunpack.c.l.b16 %v78
    %v91 = vunpack.c.l.b16 %v79
    %v92 = vunpack.c.l.b16 %v80
    %v93 = vunpack.c.l.b16 %v81
    %v94 = vpack.c.b16 %v91, %v90
    %v95 = vpack.c.b16 %v93, %v92
    %vm98 = vcmask 261120
    %v100 = vsel %vm98, %v72, 0
    %102 = vmatprep.subr.bf16.mxu0 0
    %103 = vmatpush1.bf16.msra.mxu0 0
    %104 = vmatprep.subr.bf16.mxu0 0
    %105 = vmatpush1.bf16.msra.mxu0 0
    %106 = vmatprep.subr.bf16.mxu0 0
    %107 = vmatpush1.bf16.msra.mxu0 0
    %108 = vmatprep.subr.bf16.mxu0 0
    %109 = vmatpush1.bf16.msra.mxu0 0
    %110 = vmatprep.subr.bf16.mxu0 0
    %111 = vmatpush1.bf16.msra.mxu0 0
    %112 = vmatprep.subr.bf16.mxu0 0
    %113 = vmatpush1.bf16.msra.mxu0 0
    %114 = vmatprep.subr.bf16.mxu0 0
    %115 = vmatpush1.bf16.msra.mxu0 %v95
    %116 = vmatprep.subr.bf16.mxu0 0
    %117 = vmatpush1.bf16.msra.mxu0 %v94
    %118 = vmatprep.subr.bf16.mxu0 0
    %119 = vmatpush2.bf16.msra.mxu0 0
    %120 = vmatprep.subr.bf16.mxu0 0
    %121 = vmatpush2.bf16.msra.mxu0 0
    %122 = vmatprep.subr.bf16.mxu0 0
    %123 = vmatpush2.bf16.msra.mxu0 0
    %124 = vmatprep.subr.bf16.mxu0 0
    %125 = vmatpush2.bf16.msra.mxu0 0
    %126 = vmatprep.subr.bf16.mxu0 0
    %127 = vmatpush2.bf16.msra.mxu0 0
    %128 = vmatprep.subr.bf16.mxu0 0
    %129 = vmatpush2.bf16.msra.mxu0 0
    %130 = vmatprep.subr.bf16.mxu0 0
    %131 = vmatpush2.bf16.msra.mxu0 0
    %132 = vmatprep.subr.bf16.mxu0 0
    %133 = vmatpush2.bf16.msra.mxu0 0
    %134 = vmatprep.mubr.bf16.mxu0 0
    %135 = vmatmul.mubr.bf16.gmra.mxu0 %v100
    %v136 = vpop.f32.mrf.mxu0
    %v137 = vadd.f32 %v85, %v136
    %v138 = vpop.f32.mrf.mxu0
    %v139 = vpop.f32.mrf.mxu0
    %v140 = vadd.f32 %v85, %v139
    %v141 = vpop.f32.mrf.mxu0
    %142 = vdwg.mxu0
    %v143 = vmax.f32 %v137, 0.0
    %v144 = vmax.f32 %v140, 0.0
    %v145 = vmin.f32 %v137, 0.0
    %v146 = vmin.f32 %v140, 0.0
    %v147 = vstv %s74
    %v148 = vmul.f32 %v147, %v145
    %v149 = vmul.f32 %v147, %v146
    %v150 = vadd.f32 %v143, %v148
    %v151 = vadd.f32 %v144, %v149
    %v152 = vpack.c.bf16 %v151, %v150
    %s153 = scalar_lea.vmem [#allocation5], 64
    %v154 = vld [vmem:[%s153] sm:$0xf]
    %v155 = vld [vmem:[%s153 + $0x4] sm:$0xf]
    %v156 = vld [vmem:[%s153 + $0x8] sm:$0xf]
    %v157 = vld [vmem:[%s153 + $0xc] sm:$0xf]
    %v158 = vld [vmem:[%s153 + $0x10] sm:$0xf]
    %v159 = vld [vmem:[%s153 + $0x14] sm:$0xf]
    %v160 = vld [vmem:[%s153 + $0x18] sm:$0xf]
    %v161 = vld [vmem:[%s153 + $0x1c] sm:$0xf]
    %v162 = vld [vmem:[%s153 + $0x20] sm:$0xf]
    %v163 = vld [vmem:[%s153 + $0x24] sm:$0xf]
    %v164 = vld [vmem:[%s153 + $0x28] sm:$0xf]
    %v165 = vld [vmem:[%s153 + $0x2c] sm:$0xf]
    %v166 = vld [vmem:[%s153 + $0x30] sm:$0xf]
    %v167 = vld [vmem:[%s153 + $0x34] sm:$0xf]
    %v168 = vld [vmem:[%s153 + $0x38] sm:$0xf]
    %v169 = vld [vmem:[%s153 + $0x3c] sm:$0xf]
    %v170 = vlaneseq
    %v171 = vshrl.u32 %v170, 7
    %v172 = vsub.s32 1, %v171
    %v173 = vrot.slane %v73, %v172
    %v190 = vunpack.c.l.b16 %v154
    %v191 = vunpack.c.l.b16 %v155
    %v192 = vunpack.c.l.b16 %v156
    %v193 = vunpack.c.l.b16 %v157
    %v194 = vunpack.c.l.b16 %v158
    %v195 = vunpack.c.l.b16 %v159
    %v196 = vunpack.c.l.b16 %v160
    %v197 = vunpack.c.l.b16 %v161
    %v198 = vunpack.c.l.b16 %v162
    %v199 = vunpack.c.l.b16 %v163
    %v200 = vunpack.c.l.b16 %v164
    %v201 = vunpack.c.l.b16 %v165
    %v202 = vunpack.c.l.b16 %v166
    %v203 = vunpack.c.l.b16 %v167
    %v204 = vunpack.c.l.b16 %v168
    %v205 = vunpack.c.l.b16 %v169
    %v206 = vpack.c.b16 %v191, %v190
    %v207 = vpack.c.b16 %v193, %v192
    %v208 = vpack.c.b16 %v195, %v194
    %v209 = vpack.c.b16 %v197, %v196
    %v210 = vpack.c.b16 %v199, %v198
    %v211 = vpack.c.b16 %v201, %v200
    %v212 = vpack.c.b16 %v203, %v202
    %v213 = vpack.c.b16 %v205, %v204
    %222 = vmatprep.subr.bf16.mxu0 0
    %223 = vmatpush1.bf16.msra.mxu0 %v213
    %224 = vmatprep.subr.bf16.mxu0 0
    %225 = vmatpush1.bf16.msra.mxu0 %v212
    %226 = vmatprep.subr.bf16.mxu0 0
    %227 = vmatpush1.bf16.msra.mxu0 %v211
    %228 = vmatprep.subr.bf16.mxu0 0
    %229 = vmatpush1.bf16.msra.mxu0 %v210
    %230 = vmatprep.subr.bf16.mxu0 0
    %231 = vmatpush1.bf16.msra.mxu0 %v209
    %232 = vmatprep.subr.bf16.mxu0 0
    %233 = vmatpush1.bf16.msra.mxu0 %v208
    %234 = vmatprep.subr.bf16.mxu0 0
    %235 = vmatpush1.bf16.msra.mxu0 %v207
    %236 = vmatprep.subr.bf16.mxu0 0
    %237 = vmatpush1.bf16.msra.mxu0 %v206
    %238 = vmatprep.subr.bf16.mxu0 0
    %239 = vmatpush2.bf16.msra.mxu0 0
    %240 = vmatprep.subr.bf16.mxu0 0
    %241 = vmatpush2.bf16.msra.mxu0 0
    %242 = vmatprep.subr.bf16.mxu0 0
    %243 = vmatpush2.bf16.msra.mxu0 0
    %244 = vmatprep.subr.bf16.mxu0 0
    %245 = vmatpush2.bf16.msra.mxu0 0
    %246 = vmatprep.subr.bf16.mxu0 0
    %247 = vmatpush2.bf16.msra.mxu0 0
    %248 = vmatprep.subr.bf16.mxu0 0
    %249 = vmatpush2.bf16.msra.mxu0 0
    %250 = vmatprep.subr.bf16.mxu0 0
    %251 = vmatpush2.bf16.msra.mxu0 0
    %252 = vmatprep.subr.bf16.mxu0 0
    %253 = vmatpush2.bf16.msra.mxu0 0
    %254 = vmatprep.mubr.bf16.mxu0 0
    %255 = vmatmul.mubr.bf16.gmra.mxu0 %v152
    %v256 = vpop.f32.mrf.mxu0
    %v257 = vadd.f32 %v173, %v256
    %v258 = vpop.f32.mrf.mxu0
    %v259 = vpop.f32.mrf.mxu0
    %v260 = vadd.f32 %v173, %v259
    %v261 = vpop.f32.mrf.mxu0
    %262 = vdwg.mxu0
    %v263 = vmax.f32 %v257, 0.0
    %v264 = vmax.f32 %v260, 0.0
    %v265 = vmin.f32 %v257, 0.0
    %v266 = vmin.f32 %v260, 0.0
    %v267 = vstv %s75
    %v268 = vmul.f32 %v267, %v265
    %v269 = vmul.f32 %v267, %v266
    %v270 = vadd.f32 %v263, %v268
    %v271 = vadd.f32 %v264, %v269
    %v272 = vpack.c.bf16 %v271, %v270
    %s273 = scalar_lea.vmem [#allocation5], 128
    %v274 = vld [vmem:[%s273] sm:$0xf]
    %v275 = vld [vmem:[%s273 + $0x4] sm:$0xf]
    %v276 = vld [vmem:[%s273 + $0x8] sm:$0xf]
    %v277 = vld [vmem:[%s273 + $0xc] sm:$0xf]
    %v278 = vld [vmem:[%s273 + $0x10] sm:$0xf]
    %v279 = vld [vmem:[%s273 + $0x14] sm:$0xf]
    %v280 = vld [vmem:[%s273 + $0x18] sm:$0xf]
    %v281 = vld [vmem:[%s273 + $0x1c] sm:$0xf]
    %v282 = vld [vmem:[%s273 + $0x20] sm:$0xf]
    %v283 = vld [vmem:[%s273 + $0x24] sm:$0xf]
    %v284 = vld [vmem:[%s273 + $0x28] sm:$0xf]
    %v285 = vld [vmem:[%s273 + $0x2c] sm:$0xf]
    %v286 = vld [vmem:[%s273 + $0x30] sm:$0xf]
    %v287 = vld [vmem:[%s273 + $0x34] sm:$0xf]
    %v288 = vld [vmem:[%s273 + $0x38] sm:$0xf]
    %v289 = vld [vmem:[%s273 + $0x3c] sm:$0xf]
    %s290 = scalar_lea.vmem [#allocation5], 192
    %v291 = vld [vmem:[%s290] sm:$0xf]
    %v292 = vld [vmem:[%s290 + $0x4] sm:$0xf]
    %v293 = vld [vmem:[%s290 + $0x8] sm:$0xf]
    %v294 = vld [vmem:[%s290 + $0xc] sm:$0xf]
    %v299 = vunpack.c.l.b16 %v291
    %v300 = vunpack.c.l.b16 %v292
    %v301 = vunpack.c.l.b16 %v293
    %v302 = vunpack.c.l.b16 %v294
    %v303 = vpack.c.b16 %v300, %v299
    %v304 = vpack.c.b16 %v302, %v301
    %307 = vmatprep.subr.bf16.mxu0 0
    %308 = vmatpush1.bf16.msra.mxu0 0
    %309 = vmatprep.subr.bf16.mxu0 0
    %310 = vmatpush1.bf16.msra.mxu0 0
    %311 = vmatprep.subr.bf16.mxu0 0
    %312 = vmatpush1.bf16.msra.mxu0 0
    %313 = vmatprep.subr.bf16.mxu0 0
    %314 = vmatpush1.bf16.msra.mxu0 0
    %315 = vmatprep.subr.bf16.mxu0 0
    %316 = vmatpush1.bf16.msra.mxu0 0
    %317 = vmatprep.subr.bf16.mxu0 0
    %318 = vmatpush1.bf16.msra.mxu0 0
    %319 = vmatprep.subr.bf16.mxu0 0
    %320 = vmatpush1.bf16.msra.mxu0 %v304
    %321 = vmatprep.subr.bf16.mxu0 0
    %322 = vmatpush1.bf16.msra.mxu0 %v303
    %323 = vmatprep.subr.bf16.mxu0 0
    %324 = vmatpush2.bf16.msra.mxu0 0
    %325 = vmatprep.subr.bf16.mxu0 0
    %326 = vmatpush2.bf16.msra.mxu0 0
    %327 = vmatprep.subr.bf16.mxu0 0
    %328 = vmatpush2.bf16.msra.mxu0 0
    %329 = vmatprep.subr.bf16.mxu0 0
    %330 = vmatpush2.bf16.msra.mxu0 0
    %331 = vmatprep.subr.bf16.mxu0 0
    %332 = vmatpush2.bf16.msra.mxu0 0
    %333 = vmatprep.subr.bf16.mxu0 0
    %334 = vmatpush2.bf16.msra.mxu0 0
    %335 = vmatprep.subr.bf16.mxu0 0
    %336 = vmatpush2.bf16.msra.mxu0 0
    %337 = vmatprep.subr.bf16.mxu0 0
    %338 = vmatpush2.bf16.msra.mxu0 0
    %339 = vmatprep.mubr.bf16.mxu0 0
    %340 = vmatmul.mubr.bf16.gmra.mxu0 %v100
    %v341 = vpop.f32.mrf.mxu0
    %v342 = vadd.f32 0.0, %v341
    %v343 = vpop.f32.mrf.mxu0
    %v344 = vpop.f32.mrf.mxu0
    %v345 = vadd.f32 0.0, %v344
    %v346 = vpop.f32.mrf.mxu0
    %347 = vdwg.mxu0
    %v364 = vunpack.c.l.b16 %v274
    %v365 = vunpack.c.l.b16 %v275
    %v366 = vunpack.c.l.b16 %v276
    %v367 = vunpack.c.l.b16 %v277
    %v368 = vunpack.c.l.b16 %v278
    %v369 = vunpack.c.l.b16 %v279
    %v370 = vunpack.c.l.b16 %v280
    %v371 = vunpack.c.l.b16 %v281
    %v372 = vunpack.c.l.b16 %v282
    %v373 = vunpack.c.l.b16 %v283
    %v374 = vunpack.c.l.b16 %v284
    %v375 = vunpack.c.l.b16 %v285
    %v376 = vunpack.c.l.b16 %v286
    %v377 = vunpack.c.l.b16 %v287
    %v378 = vunpack.c.l.b16 %v288
    %v379 = vunpack.c.l.b16 %v289
    %v380 = vpack.c.b16 %v365, %v364
    %v381 = vpack.c.b16 %v367, %v366
    %v382 = vpack.c.b16 %v369, %v368
    %v383 = vpack.c.b16 %v371, %v370
    %v384 = vpack.c.b16 %v373, %v372
    %v385 = vpack.c.b16 %v375, %v374
    %v386 = vpack.c.b16 %v377, %v376
    %v387 = vpack.c.b16 %v379, %v378
    %396 = vmatprep.subr.bf16.mxu0 0
    %397 = vmatpush1.bf16.msra.mxu0 %v387
    %398 = vmatprep.subr.bf16.mxu0 0
    %399 = vmatpush1.bf16.msra.mxu0 %v386
    %400 = vmatprep.subr.bf16.mxu0 0
    %401 = vmatpush1.bf16.msra.mxu0 %v385
    %402 = vmatprep.subr.bf16.mxu0 0
    %403 = vmatpush1.bf16.msra.mxu0 %v384
    %404 = vmatprep.subr.bf16.mxu0 0
    %405 = vmatpush1.bf16.msra.mxu0 %v383
    %406 = vmatprep.subr.bf16.mxu0 0
    %407 = vmatpush1.bf16.msra.mxu0 %v382
    %408 = vmatprep.subr.bf16.mxu0 0
    %409 = vmatpush1.bf16.msra.mxu0 %v381
    %410 = vmatprep.subr.bf16.mxu0 0
    %411 = vmatpush1.bf16.msra.mxu0 %v380
    %412 = vmatprep.subr.bf16.mxu0 0
    %413 = vmatpush2.bf16.msra.mxu0 0
    %414 = vmatprep.subr.bf16.mxu0 0
    %415 = vmatpush2.bf16.msra.mxu0 0
    %416 = vmatprep.subr.bf16.mxu0 0
    %417 = vmatpush2.bf16.msra.mxu0 0
    %418 = vmatprep.subr.bf16.mxu0 0
    %419 = vmatpush2.bf16.msra.mxu0 0
    %420 = vmatprep.subr.bf16.mxu0 0
    %421 = vmatpush2.bf16.msra.mxu0 0
    %422 = vmatprep.subr.bf16.mxu0 0
    %423 = vmatpush2.bf16.msra.mxu0 0
    %424 = vmatprep.subr.bf16.mxu0 0
    %425 = vmatpush2.bf16.msra.mxu0 0
    %426 = vmatprep.subr.bf16.mxu0 0
    %427 = vmatpush2.bf16.msra.mxu0 0
    %428 = vmatprep.mubr.bf16.mxu0 0
    %429 = vmatmul.mubr.bf16.gmra.mxu0 %v272
    %v430 = vpop.f32.mrf.mxu0
    %v431 = vadd.f32 %v342, %v430
    %v432 = vpop.f32.mrf.mxu0
    %v433 = vpop.f32.mrf.mxu0
    %v434 = vadd.f32 %v345, %v433
    %v435 = vpop.f32.mrf.mxu0
    %436 = vdwg.mxu0
    %v437 = vlaneseq
    %v438 = vshrl.u32 %v437, 7
    %v439 = vsub.s32 2, %v438
    %v440 = vrot.slane %v73, %v439
    %v441 = vadd.f32 %v431, %v440
    %v442 = vadd.f32 %v434, %v440
    %v443 = vmax.f32 %v441, 0.0
    %v444 = vmax.f32 %v442, 0.0
    %v445 = vmin.f32 %v441, 0.0
    %v446 = vmin.f32 %v442, 0.0
    %v447 = vstv %s76
    %v448 = vmul.f32 %v447, %v445
    %v449 = vmul.f32 %v447, %v446
    %v450 = vadd.f32 %v443, %v448
    %v451 = vadd.f32 %v444, %v449
    %v452 = vpack.c.bf16 %v451, %v450
    %s453 = scalar_lea.vmem [#allocation5], 256
    %v454 = vld [vmem:[%s453] sm:$0xf]
    %v455 = vld [vmem:[%s453 + $0x4] sm:$0xf]
    %v456 = vld [vmem:[%s453 + $0x8] sm:$0xf]
    %v457 = vld [vmem:[%s453 + $0xc] sm:$0xf]
    %v458 = vld [vmem:[%s453 + $0x10] sm:$0xf]
    %v459 = vld [vmem:[%s453 + $0x14] sm:$0xf]
    %v460 = vld [vmem:[%s453 + $0x18] sm:$0xf]
    %v461 = vld [vmem:[%s453 + $0x1c] sm:$0xf]
    %v462 = vld [vmem:[%s453 + $0x20] sm:$0xf]
    %v463 = vld [vmem:[%s453 + $0x24] sm:$0xf]
    %v464 = vld [vmem:[%s453 + $0x28] sm:$0xf]
    %v465 = vld [vmem:[%s453 + $0x2c] sm:$0xf]
    %v466 = vld [vmem:[%s453 + $0x30] sm:$0xf]
    %v467 = vld [vmem:[%s453 + $0x34] sm:$0xf]
    %v468 = vld [vmem:[%s453 + $0x38] sm:$0xf]
    %v469 = vld [vmem:[%s453 + $0x3c] sm:$0xf]
    %v470 = vlaneseq
    %v471 = vshrl.u32 %v470, 7
    %v472 = vsub.s32 3, %v471
    %v473 = vrot.slane %v73, %v472
    %v490 = vunpack.c.l.b16 %v454
    %v491 = vunpack.c.l.b16 %v455
    %v492 = vunpack.c.l.b16 %v456
    %v493 = vunpack.c.l.b16 %v457
    %v494 = vunpack.c.l.b16 %v458
    %v495 = vunpack.c.l.b16 %v459
    %v496 = vunpack.c.l.b16 %v460
    %v497 = vunpack.c.l.b16 %v461
    %v498 = vunpack.c.l.b16 %v462
    %v499 = vunpack.c.l.b16 %v463
    %v500 = vunpack.c.l.b16 %v464
    %v501 = vunpack.c.l.b16 %v465
    %v502 = vunpack.c.l.b16 %v466
    %v503 = vunpack.c.l.b16 %v467
    %v504 = vunpack.c.l.b16 %v468
    %v505 = vunpack.c.l.b16 %v469
    %v506 = vpack.c.b16 %v491, %v490
    %v507 = vpack.c.b16 %v493, %v492
    %v508 = vpack.c.b16 %v495, %v494
    %v509 = vpack.c.b16 %v497, %v496
    %v510 = vpack.c.b16 %v499, %v498
    %v511 = vpack.c.b16 %v501, %v500
    %v512 = vpack.c.b16 %v503, %v502
    %v513 = vpack.c.b16 %v505, %v504
    %522 = vmatprep.subr.bf16.mxu0 0
    %523 = vmatpush1.bf16.msra.mxu0 %v513
    %524 = vmatprep.subr.bf16.mxu0 0
    %525 = vmatpush1.bf16.msra.mxu0 %v512
    %526 = vmatprep.subr.bf16.mxu0 0
    %527 = vmatpush1.bf16.msra.mxu0 %v511
    %528 = vmatprep.subr.bf16.mxu0 0
    %529 = vmatpush1.bf16.msra.mxu0 %v510
    %530 = vmatprep.subr.bf16.mxu0 0
    %531 = vmatpush1.bf16.msra.mxu0 %v509
    %532 = vmatprep.subr.bf16.mxu0 0
    %533 = vmatpush1.bf16.msra.mxu0 %v508
    %534 = vmatprep.subr.bf16.mxu0 0
    %535 = vmatpush1.bf16.msra.mxu0 %v507
    %536 = vmatprep.subr.bf16.mxu0 0
    %537 = vmatpush1.bf16.msra.mxu0 %v506
    %538 = vmatprep.subr.bf16.mxu0 0
    %539 = vmatpush2.bf16.msra.mxu0 0
    %540 = vmatprep.subr.bf16.mxu0 0
    %541 = vmatpush2.bf16.msra.mxu0 0
    %542 = vmatprep.subr.bf16.mxu0 0
    %543 = vmatpush2.bf16.msra.mxu0 0
    %544 = vmatprep.subr.bf16.mxu0 0
    %545 = vmatpush2.bf16.msra.mxu0 0
    %546 = vmatprep.subr.bf16.mxu0 0
    %547 = vmatpush2.bf16.msra.mxu0 0
    %548 = vmatprep.subr.bf16.mxu0 0
    %549 = vmatpush2.bf16.msra.mxu0 0
    %550 = vmatprep.subr.bf16.mxu0 0
    %551 = vmatpush2.bf16.msra.mxu0 0
    %552 = vmatprep.subr.bf16.mxu0 0
    %553 = vmatpush2.bf16.msra.mxu0 0
    %554 = vmatprep.mubr.bf16.mxu0 0
    %555 = vmatmul.mubr.bf16.gmra.mxu0 %v452
    %v556 = vpop.f32.mrf.mxu0
    %v557 = vadd.f32 %v473, %v556
    %v558 = vpop.f32.mrf.mxu0
    %v559 = vpop.f32.mrf.mxu0
    %v560 = vadd.f32 %v473, %v559
    %v561 = vpop.f32.mrf.mxu0
    %562 = vdwg.mxu0
    %v563 = vmax.f32 %v557, 0.0
    %v564 = vmax.f32 %v560, 0.0
    %v565 = vmin.f32 %v557, 0.0
    %v566 = vmin.f32 %v560, 0.0
    %v567 = vstv %s77
    %v568 = vmul.f32 %v567, %v565
    %v569 = vmul.f32 %v567, %v566
    %v570 = vadd.f32 %v563, %v568
    %v571 = vadd.f32 %v564, %v569
    %v572 = vpack.c.bf16 %v571, %v570
    %s573 = scalar_lea.vmem [#allocation5], 320
    %v574 = vld [vmem:[%s573] sm:$0xf]
    %v575 = vld [vmem:[%s573 + $0x4] sm:$0xf]
    %v576 = vld [vmem:[%s573 + $0x8] sm:$0xf]
    %v577 = vld [vmem:[%s573 + $0xc] sm:$0xf]
    %v578 = vld [vmem:[%s573 + $0x10] sm:$0xf]
    %v579 = vld [vmem:[%s573 + $0x14] sm:$0xf]
    %v580 = vld [vmem:[%s573 + $0x18] sm:$0xf]
    %v581 = vld [vmem:[%s573 + $0x1c] sm:$0xf]
    %v582 = vld [vmem:[%s573 + $0x20] sm:$0xf]
    %v583 = vld [vmem:[%s573 + $0x24] sm:$0xf]
    %v584 = vld [vmem:[%s573 + $0x28] sm:$0xf]
    %v585 = vld [vmem:[%s573 + $0x2c] sm:$0xf]
    %v586 = vld [vmem:[%s573 + $0x30] sm:$0xf]
    %v587 = vld [vmem:[%s573 + $0x34] sm:$0xf]
    %v588 = vld [vmem:[%s573 + $0x38] sm:$0xf]
    %v589 = vld [vmem:[%s573 + $0x3c] sm:$0xf]
    %v590 = vlaneseq
    %v591 = vshrl.u32 %v590, 7
    %v592 = vsub.s32 4, %v591
    %v593 = vrot.slane %v73, %v592
    %v610 = vunpack.c.l.b16 %v574
    %v611 = vunpack.c.l.b16 %v575
    %v612 = vunpack.c.l.b16 %v576
    %v613 = vunpack.c.l.b16 %v577
    %v614 = vunpack.c.l.b16 %v578
    %v615 = vunpack.c.l.b16 %v579
    %v616 = vunpack.c.l.b16 %v580
    %v617 = vunpack.c.l.b16 %v581
    %v618 = vunpack.c.l.b16 %v582
    %v619 = vunpack.c.l.b16 %v583
    %v620 = vunpack.c.l.b16 %v584
    %v621 = vunpack.c.l.b16 %v585
    %v622 = vunpack.c.l.b16 %v586
    %v623 = vunpack.c.l.b16 %v587
    %v624 = vunpack.c.l.b16 %v588
    %v625 = vunpack.c.l.b16 %v589
    %v626 = vpack.c.b16 %v611, %v610
    %v627 = vpack.c.b16 %v613, %v612
    %v628 = vpack.c.b16 %v615, %v614
    %v629 = vpack.c.b16 %v617, %v616
    %v630 = vpack.c.b16 %v619, %v618
    %v631 = vpack.c.b16 %v621, %v620
    %v632 = vpack.c.b16 %v623, %v622
    %v633 = vpack.c.b16 %v625, %v624
    %642 = vmatprep.subr.bf16.mxu0 0
    %643 = vmatpush1.bf16.msra.mxu0 %v633
    %644 = vmatprep.subr.bf16.mxu0 0
    %645 = vmatpush1.bf16.msra.mxu0 %v632
    %646 = vmatprep.subr.bf16.mxu0 0
    %647 = vmatpush1.bf16.msra.mxu0 %v631
    %648 = vmatprep.subr.bf16.mxu0 0
    %649 = vmatpush1.bf16.msra.mxu0 %v630
    %650 = vmatprep.subr.bf16.mxu0 0
    %651 = vmatpush1.bf16.msra.mxu0 %v629
    %652 = vmatprep.subr.bf16.mxu0 0
    %653 = vmatpush1.bf16.msra.mxu0 %v628
    %654 = vmatprep.subr.bf16.mxu0 0
    %655 = vmatpush1.bf16.msra.mxu0 %v627
    %656 = vmatprep.subr.bf16.mxu0 0
    %657 = vmatpush1.bf16.msra.mxu0 %v626
    %658 = vmatprep.subr.bf16.mxu0 0
    %659 = vmatpush2.bf16.msra.mxu0 0
    %660 = vmatprep.subr.bf16.mxu0 0
    %661 = vmatpush2.bf16.msra.mxu0 0
    %662 = vmatprep.subr.bf16.mxu0 0
    %663 = vmatpush2.bf16.msra.mxu0 0
    %664 = vmatprep.subr.bf16.mxu0 0
    %665 = vmatpush2.bf16.msra.mxu0 0
    %666 = vmatprep.subr.bf16.mxu0 0
    %667 = vmatpush2.bf16.msra.mxu0 0
    %668 = vmatprep.subr.bf16.mxu0 0
    %669 = vmatpush2.bf16.msra.mxu0 0
    %670 = vmatprep.subr.bf16.mxu0 0
    %671 = vmatpush2.bf16.msra.mxu0 0
    %672 = vmatprep.subr.bf16.mxu0 0
    %673 = vmatpush2.bf16.msra.mxu0 0
    %674 = vmatprep.mubr.bf16.mxu0 0
    %675 = vmatmul.mubr.bf16.gmra.mxu0 %v572
    %v676 = vpop.f32.mrf.mxu0
    %v677 = vadd.f32 %v593, %v676
    %v678 = vpop.f32.mrf.mxu0
    %v679 = vpop.f32.mrf.mxu0
    %v680 = vadd.f32 %v593, %v679
    %v681 = vpop.f32.mrf.mxu0
    %682 = vdwg.mxu0
    %vm683 = vcmask 31744
    %684 = vst.msk [vmem:[%s4] sm:$0xff] %vm683, %v677
    %685 = vst.msk [vmem:[%s4 + $0x8] sm:$0xff] %vm683, %v680
    // Predicated region
    $region34: #{tpu_custom_call.1} parent=1 // pred_check
      _
    $region35: #{tpu_custom_call.1} parent=1 // pred_check_branch
      %687 = sbr.rel (0) target = $region37
    $region36: #{tpu_custom_call.1} parent=1 // pred_region
      _
    $region37: #{tpu_custom_call.1} parent=1 // pred_fallthru
      _
    // Predicated region
    $region38: #{tpu_custom_call.1} parent=1 // pred_check
      _
    $region39: #{tpu_custom_call.1} parent=1 // pred_check_branch
      %689 = sbr.rel (0) target = $region41
    $region40: #{tpu_custom_call.1} parent=1 // pred_region
      _
    $region41: #{tpu_custom_call.1} parent=1 // pred_fallthru
      _
    %690 = vsyncpa [#allocation3], 1
    %691 = vsyncpa [#allocation6], 1
    %692 = vsyncpa [#allocation4], 1

</llo_original>
